<compile_context>
chip_gen: v7x
topology: tpu7x:2x2x1
jax: 0.10.0
libtpu: 0.0.40
codegen_flags: <defaults>
</compile_context>

<pallas_src>
import functools

import jax
import jax.numpy as jnp
from jax.experimental import pallas as pl
from jax.experimental.pallas import tpu as pltpu

ACTION_PAD = 128                  # lane-dense padded action dim (compute width)
MAX_BATCH_TILE = 4096             # batch tile cap (fits comfortably in 32 MiB VMEM)
NARROW_OUTPUT_MIN_BATCH = 16384   # switch to narrow (masked) mean output above this B
VMEM_LIMIT_BYTES = 32 * 1024 * 1024


def _round_up(x, m):
    return ((x + m - 1) // m) * m


def _policy_kernel(x_ref, w1_ref, b1_ref, w2_ref, b2_ref, w3_ref, b3_ref,
                   mean_ref, *, bf16_act=False):
    """One batch tile of the fused actor MLP. All weights resident in VMEM."""
    x = x_ref[...]                                                    # [TB, S]
    pre1 = (jnp.dot(x, w1_ref[...], preferred_element_type=jnp.float32)
            + b1_ref[...])                                            # [TB, Hp]
    h1 = jnp.tanh(pre1.astype(jnp.bfloat16)) if bf16_act else jnp.tanh(pre1)
    pre2 = (jnp.dot(h1, w2_ref[...], preferred_element_type=jnp.float32)
            + b2_ref[...])                                            # [TB, Hp]
    h2 = jnp.tanh(pre2.astype(jnp.bfloat16)) if bf16_act else jnp.tanh(pre2)
    mean = (jnp.dot(h2, w3_ref[...], preferred_element_type=jnp.float32)
            + b3_ref[...])                                            # [TB, 128]
    out_w = mean_ref.shape[-1]    # 128 (lane-dense) or round_up(A, 8) (narrow)
    mean_ref[...] = mean[:, :out_w].astype(mean_ref.dtype)


def policy_forward(x, params, *, bf16_act=False):
    """Returns (action_mean [B, A], sigma [A]) of the Normal distribution."""
    w1, b1, w2, b2, w3, b3, sigma_param = params
    B, S = x.shape
    Hp = w1.shape[1]                       # hidden padded to 128
    A = sigma_param.shape[0]
    Ap = w3.shape[1]                       # ACTION_PAD (128), compute width

    # Batch tile: bucketed power of 2 (single compile per bucket), capped.
    TB = min(MAX_BATCH_TILE, max(8, pl.next_power_of_2(B)))
    grid = (pl.cdiv(B, TB),)               # overhanging last block, no jnp.pad

    # Output lane width: lane-dense for small/medium B; narrow (masked store,
    # ~16x less HBM writeback) once the write becomes the dominant cost.
    out_w = Ap if B < NARROW_OUTPUT_MIN_BATCH else _round_up(A, 8)

    cost = pl.CostEstimate(
        flops=2 * B * (S * Hp + Hp * Hp + Hp * Ap),
        transcendentals=2 * B * Hp,
        bytes_accessed=4 * (B * S + S * Hp + Hp + Hp * Hp + Hp
                            + Hp * Ap + Ap + B * out_w),
    )

    mean_pad = pl.pallas_call(
        functools.partial(_policy_kernel, bf16_act=bf16_act),
        out_shape=jax.ShapeDtypeStruct((B, out_w), jnp.float32),
        grid=grid,
        in_specs=[
            # x streams over the batch grid
            pl.BlockSpec((TB, S), lambda i: (i, 0)),
            # weights / biases: constant block index -> resident in VMEM
            pl.BlockSpec((S, Hp), lambda i: (0, 0)),
            pl.BlockSpec((1, Hp), lambda i: (0, 0)),
            pl.BlockSpec((Hp, Hp), lambda i: (0, 0)),
            pl.BlockSpec((1, Hp), lambda i: (0, 0)),
            pl.BlockSpec((Hp, Ap), lambda i: (0, 0)),
            pl.BlockSpec((1, Ap), lambda i: (0, 0)),
        ],
        out_specs=pl.BlockSpec((TB, out_w), lambda i: (i, 0)),
        compiler_params=pltpu.CompilerParams(
            dimension_semantics=("parallel",),
            vmem_limit_bytes=VMEM_LIMIT_BYTES,
        ),
        cost_estimate=cost,
    )(x, w1, b1, w2, b2, w3, b3)

    mean = mean_pad[:, :A]     # rows are already exactly [0, B)

    # sigma depends only on a parameter -> plain JAX (stable softplus).
    sigma = (jnp.maximum(sigma_param, 0.0)
             + jnp.log1p(jnp.exp(-jnp.abs(sigma_param))))
    return mean, sigma


def init_policy_params(key, state_space, action_space, hidden=64):
    """Matches Policy.init_weights(): weights ~ N(0,1), biases zero,
    sigma param initialized to 0.5.

    Parameters are stored kernel-ready: [in, out] layout, biases as [1, out],
    hidden dim zero-padded to a multiple of 128 and the action dim padded to
    ACTION_PAD lanes.  The padding is numerically exact (tanh(0)=0, zero
    rows/cols contribute nothing), so the real columns are bit-identical to
    the unpadded network."""
    k1, k2, k3 = jax.random.split(key, 3)
    Hp = _round_up(hidden, 128)
    Ap = ACTION_PAD

    w1 = jax.random.normal(k1, (state_space, hidden), jnp.float32)
    w2 = jax.random.normal(k2, (hidden, hidden), jnp.float32)
    w3 = jax.random.normal(k3, (hidden, action_space), jnp.float32)

    w1p = jnp.zeros((state_space, Hp), jnp.float32).at[:, :hidden].set(w1)
    b1p = jnp.zeros((1, Hp), jnp.float32)
    w2p = jnp.zeros((Hp, Hp), jnp.float32).at[:hidden, :hidden].set(w2)
    b2p = jnp.zeros((1, Hp), jnp.float32)
    w3p = jnp.zeros((Hp, Ap), jnp.float32).at[:hidden, :action_space].set(w3)
    b3p = jnp.zeros((1, Ap), jnp.float32)

    sigma_param = jnp.zeros((action_space,), jnp.float32) + 0.5
    return (w1p, b1p, w2p, b2p, w3p, b3p, sigma_param)


if __name__ == "__main__":
    state_space = 8
    action_space = 4
    batch = 2

    key = jax.random.PRNGKey(0)
    k_params, k_x = jax.random.split(key)
    params = init_policy_params(k_params, state_space, action_space)
    x = jax.random.normal(k_x, (batch, state_space), jnp.float32)

    mean, sigma = jax.jit(policy_forward)(x, params)
    jax.block_until_ready((mean, sigma))

    # Reference check in plain JAX (padding is exact, so the padded params
    # reproduce the unpadded network bit-for-bit on the real columns).
    w1, b1, w2, b2, w3, b3, sp = params
    h1 = jnp.tanh(x @ w1 + b1)
    h2 = jnp.tanh(h1 @ w2 + b2)
    ref_mean = (h2 @ w3 + b3)[:, :action_space]
    ref_sigma = jnp.log1p(jnp.exp(sp))
    assert mean.shape == (batch, action_space)
    assert jnp.allclose(mean, ref_mean, atol=1e-4, rtol=1e-4)
    assert jnp.allclose(sigma, ref_sigma, atol=1e-5, rtol=1e-5)

    # TODO(synk): torch.distributions.Normal has no tensor equivalent; we
    # return its parameters (mean, sigma) which fully characterize it.
    print("KERNEL_OK")
</pallas_src>

<mosaic_0001>
module attributes {stable_mosaic.version = 11 : i64} {
  func.func @_policy_kernel(%arg0: i32, %arg1: memref<8x8xf32, #tpu.memory_space<vmem>>, %arg2: memref<8x128xf32, #tpu.memory_space<vmem>>, %arg3: memref<1x128xf32, #tpu.memory_space<vmem>>, %arg4: memref<128x128xf32, #tpu.memory_space<vmem>>, %arg5: memref<1x128xf32, #tpu.memory_space<vmem>>, %arg6: memref<128x128xf32, #tpu.memory_space<vmem>>, %arg7: memref<1x128xf32, #tpu.memory_space<vmem>>, %arg8: memref<8x128xf32, #tpu.memory_space<vmem>>) attributes {dimension_semantics = [#tpu.dimension_semantics<parallel>], iteration_bounds = array<i64: 1>, scalar_prefetch = 0 : i64, scratch_operands = 0 : i64, tpu.core_type = #tpu.core_type<tc>, window_params = [{transform_indices = @transform_0, window_bounds = array<i64: 8, 8>}, {pipeline_mode = #tpu.pipeline_mode<synchronous>, transform_indices = @transform_1, window_bounds = array<i64: 8, 128>}, {pipeline_mode = #tpu.pipeline_mode<synchronous>, transform_indices = @transform_2, window_bounds = array<i64: 1, 128>}, {pipeline_mode = #tpu.pipeline_mode<synchronous>, transform_indices = @transform_3, window_bounds = array<i64: 128, 128>}, {pipeline_mode = #tpu.pipeline_mode<synchronous>, transform_indices = @transform_4, window_bounds = array<i64: 1, 128>}, {pipeline_mode = #tpu.pipeline_mode<synchronous>, transform_indices = @transform_5, window_bounds = array<i64: 128, 128>}, {pipeline_mode = #tpu.pipeline_mode<synchronous>, transform_indices = @transform_6, window_bounds = array<i64: 1, 128>}, {transform_indices = @transform_7, window_bounds = array<i64: 8, 128>}]} {
    %c0 = arith.constant 0 : index
    %c0_0 = arith.constant 0 : index
    %0 = vector.load %arg1[%c0, %c0_0] : memref<8x8xf32, #tpu.memory_space<vmem>>, vector<8x8xf32>
    %c0_1 = arith.constant 0 : index
    %c0_2 = arith.constant 0 : index
    %1 = vector.load %arg2[%c0_1, %c0_2] : memref<8x128xf32, #tpu.memory_space<vmem>>, vector<8x128xf32>
    %cst = arith.constant dense<0.000000e+00> : vector<8x128xf32>
    %2 = tpu.matmul %0, %1, %cst {dimension_numbers = #tpu.dot_dimension_numbers<[1], [0], [0], [1], [0, 0, 1, 1], [], []>} : vector<8x8xf32>, vector<8x128xf32>, vector<8x128xf32> -> vector<8x128xf32>
    %c0_3 = arith.constant 0 : index
    %c0_4 = arith.constant 0 : index
    %3 = vector.load %arg3[%c0_3, %c0_4] : memref<1x128xf32, #tpu.memory_space<vmem>>, vector<1x128xf32>
    %4 = vector.broadcast %3 : vector<1x128xf32> to vector<8x128xf32>
    %5 = arith.addf %2, %4 : vector<8x128xf32>
    %6 = math.tanh %5 : vector<8x128xf32>
    %c0_5 = arith.constant 0 : index
    %c0_6 = arith.constant 0 : index
    %7 = vector.load %arg4[%c0_5, %c0_6] : memref<128x128xf32, #tpu.memory_space<vmem>>, vector<128x128xf32>
    %cst_7 = arith.constant dense<0.000000e+00> : vector<8x128xf32>
    %8 = tpu.matmul %6, %7, %cst_7 {dimension_numbers = #tpu.dot_dimension_numbers<[1], [0], [0], [1], [0, 0, 1, 1], [], []>} : vector<8x128xf32>, vector<128x128xf32>, vector<8x128xf32> -> vector<8x128xf32>
    %c0_8 = arith.constant 0 : index
    %c0_9 = arith.constant 0 : index
    %9 = vector.load %arg5[%c0_8, %c0_9] : memref<1x128xf32, #tpu.memory_space<vmem>>, vector<1x128xf32>
    %10 = vector.broadcast %9 : vector<1x128xf32> to vector<8x128xf32>
    %11 = arith.addf %8, %10 : vector<8x128xf32>
    %12 = math.tanh %11 : vector<8x128xf32>
    %c0_10 = arith.constant 0 : index
    %c0_11 = arith.constant 0 : index
    %13 = vector.load %arg6[%c0_10, %c0_11] : memref<128x128xf32, #tpu.memory_space<vmem>>, vector<128x128xf32>
    %cst_12 = arith.constant dense<0.000000e+00> : vector<8x128xf32>
    %14 = tpu.matmul %12, %13, %cst_12 {dimension_numbers = #tpu.dot_dimension_numbers<[1], [0], [0], [1], [0, 0, 1, 1], [], []>} : vector<8x128xf32>, vector<128x128xf32>, vector<8x128xf32> -> vector<8x128xf32>
    %c0_13 = arith.constant 0 : index
    %c0_14 = arith.constant 0 : index
    %15 = vector.load %arg7[%c0_13, %c0_14] : memref<1x128xf32, #tpu.memory_space<vmem>>, vector<1x128xf32>
    %16 = vector.broadcast %15 : vector<1x128xf32> to vector<8x128xf32>
    %17 = arith.addf %14, %16 : vector<8x128xf32>
    %c0_15 = arith.constant 0 : index
    %c0_16 = arith.constant 0 : index
    %18 = vector.load %arg8[%c0_15, %c0_16] : memref<8x128xf32, #tpu.memory_space<vmem>>, vector<8x128xf32>
    tpu.vector_store %arg8[%c0_15, %c0_16], %17 {strides = array<i32>} : memref<8x128xf32, #tpu.memory_space<vmem>>, vector<8x128xf32>,
    return
  }
  func.func @transform_0(%arg0: i32) -> (i32, i32) {
    %c0_i32 = arith.constant 0 : i32
    %c0_i32_0 = arith.constant 0 : i32
    return %arg0, %c0_i32 : i32, i32
  }
  func.func @transform_1(%arg0: i32) -> (i32, i32) {
    %c0_i32 = arith.constant 0 : i32
    %c0_i32_0 = arith.constant 0 : i32
    %c0_i32_1 = arith.constant 0 : i32
    return %c0_i32, %c0_i32_0 : i32, i32
  }
  func.func @transform_2(%arg0: i32) -> (i32, i32) {
    %c0_i32 = arith.constant 0 : i32
    %c0_i32_0 = arith.constant 0 : i32
    %c0_i32_1 = arith.constant 0 : i32
    return %c0_i32, %c0_i32_0 : i32, i32
  }
  func.func @transform_3(%arg0: i32) -> (i32, i32) {
    %c0_i32 = arith.constant 0 : i32
    %c0_i32_0 = arith.constant 0 : i32
    %c0_i32_1 = arith.constant 0 : i32
    return %c0_i32, %c0_i32_0 : i32, i32
  }
  func.func @transform_4(%arg0: i32) -> (i32, i32) {
    %c0_i32 = arith.constant 0 : i32
    %c0_i32_0 = arith.constant 0 : i32
    %c0_i32_1 = arith.constant 0 : i32
    return %c0_i32, %c0_i32_0 : i32, i32
  }
  func.func @transform_5(%arg0: i32) -> (i32, i32) {
    %c0_i32 = arith.constant 0 : i32
    %c0_i32_0 = arith.constant 0 : i32
    %c0_i32_1 = arith.constant 0 : i32
    return %c0_i32, %c0_i32_0 : i32, i32
  }
  func.func @transform_6(%arg0: i32) -> (i32, i32) {
    %c0_i32 = arith.constant 0 : i32
    %c0_i32_0 = arith.constant 0 : i32
    %c0_i32_1 = arith.constant 0 : i32
    return %c0_i32, %c0_i32_0 : i32, i32
  }
  func.func @transform_7(%arg0: i32) -> (i32, i32) {
    %c0_i32 = arith.constant 0 : i32
    %c0_i32_0 = arith.constant 0 : i32
    return %arg0, %c0_i32 : i32, i32
  }
}

</mosaic_0001>

<llo_original>
// kernel: policy_forward.1
$region0: #{policy_forward.1}
  #allocation0 [shape = 'u32[]', space=smem, size = 0x4, offset = 0x4, fixed_abs, tag = 'smem constant byte address 0x4 - core index']
  #allocation1 [shape = 'u32[144,128]{1,0:T(1,128)}', space=vmem, size = 0x12000, scoped, tag = 'internal scratch']
  %s0 = inlined_call_operand.vmem [shape: f32[2,8], index: 0, kind: input, shape index: {}]
  %s1 = inlined_call_operand.hbm [shape: f32[8,128], index: 1, kind: input, shape index: {}]
  %s2 = inlined_call_operand.vmem [shape: f32[1,128], index: 2, kind: input, shape index: {}]
  %s3 = inlined_call_operand.hbm [shape: f32[128,128], index: 3, kind: input, shape index: {}]
  %s4 = inlined_call_operand.vmem [shape: f32[1,128], index: 4, kind: input, shape index: {}]
  %s5 = inlined_call_operand.hbm [shape: f32[128,128], index: 5, kind: input, shape index: {}]
  %s6 = inlined_call_operand.vmem [shape: f32[1,128], index: 6, kind: input, shape index: {}]
  %s7 = inlined_call_operand.hbm [shape: f32[2,128], index: 7, kind: output, shape index: {}]
  %s8 = sld [smem:[#allocation0]]
  $region50: #{policy_forward.1} parent=0
    _
  %s10 = ssub.s32 1, %s8
  %s11 = scalar_select 0, %s10, %s8
  $region1: #{policy_forward.1} parent=0
    #allocation2 [shape = 'u8[4096]{0}', space=vmem, size = 0x1000, scoped, tag = 'input window, operand 1, single buffered']
    #allocation3 [shape = 's32[1]{0}', space=sflag, size = 0x4, scoped, tag = 'scoped memory for policy_forward.1']
    #allocation4 [shape = 's32[1]{0}', space=sflag, size = 0x4, scoped, tag = 'scoped memory for policy_forward.1']
    #allocation5 [shape = 'u8[65536]{0}', space=vmem, size = 0x10000, scoped, tag = 'input window, operand 3, single buffered']
    #allocation6 [shape = 's32[1]{0}', space=sflag, size = 0x4, scoped, tag = 'scoped memory for policy_forward.1']
    #allocation7 [shape = 'u8[65536]{0}', space=vmem, size = 0x10000, scoped, tag = 'input window, operand 5, single buffered']
    #allocation8 [shape = 'u8[4096]{0}', space=vmem, size = 0x1000, scoped, tag = 'output window, operand 0, single buffered']
    %12 = vsyncpa [#allocation3], 0
    %13 = vsyncpa [#allocation6], 0
    %14 = vsyncpa [#allocation4], 0
    // Predicated region
    $region2: #{policy_forward.1} parent=1 // pred_check
      _
    $region3: #{policy_forward.1} parent=1 // pred_check_branch
      %16 = sbr.rel (0) target = $region5
    $region4: #{policy_forward.1} parent=1 // pred_region
      _
    $region5: #{policy_forward.1} parent=1 // pred_fallthru
      _
    // Predicated region
    $region6: #{policy_forward.1} parent=1 // pred_check
      _
    $region7: #{policy_forward.1} parent=1 // pred_check_branch
      %18 = sbr.rel (0) target = $region9
    $region8: #{policy_forward.1} parent=1 // pred_region
      %s20 = ssub.s32 128, 128
      %21 = vsyncadd [#allocation3], %s20
      %s23 = sshll.u32 [#allocation2], 4
      %s24 = int_to_ptr.vmem [resolvable:$true] %s23
      %26 = dma.hbm_to_vmem [thread:$0]  %s1, 128, %s24, [#allocation3]
    $region9: #{policy_forward.1} parent=1 // pred_fallthru
      _
    // Predicated region
    $region10: #{policy_forward.1} parent=1 // pred_check
      _
    $region11: #{policy_forward.1} parent=1 // pred_check_branch
      %28 = sbr.rel (0) target = $region13
    $region12: #{policy_forward.1} parent=1 // pred_region
      _
    $region13: #{policy_forward.1} parent=1 // pred_fallthru
      _
    // Predicated region
    $region14: #{policy_forward.1} parent=1 // pred_check
      _
    $region15: #{policy_forward.1} parent=1 // pred_check_branch
      %30 = sbr.rel (0) target = $region17
    $region16: #{policy_forward.1} parent=1 // pred_region
      %s32 = ssub.s32 2048, 2048
      %33 = vsyncadd [#allocation6], %s32
      %s34 = sshll.u32 [#allocation5], 4
      %s35 = int_to_ptr.vmem [resolvable:$true] %s34
      %40 = dma.hbm_to_vmem [thread:$0]  %s3, 2048, %s35, [#allocation6], 128, 128, 8
    $region17: #{policy_forward.1} parent=1 // pred_fallthru
      _
    // Predicated region
    $region18: #{policy_forward.1} parent=1 // pred_check
      _
    $region19: #{policy_forward.1} parent=1 // pred_check_branch
      %42 = sbr.rel (0) target = $region21
    $region20: #{policy_forward.1} parent=1 // pred_region
      _
    $region21: #{policy_forward.1} parent=1 // pred_fallthru
      _
    // Predicated region
    $region22: #{policy_forward.1} parent=1 // pred_check
      _
    $region23: #{policy_forward.1} parent=1 // pred_check_branch
      %44 = sbr.rel (0) target = $region25
    $region24: #{policy_forward.1} parent=1 // pred_region
      %s46 = ssub.s32 2048, 2048
      %47 = vsyncadd [#allocation6], %s46
      %s48 = sshll.u32 [#allocation7], 4
      %s49 = int_to_ptr.vmem [resolvable:$true] %s48
      %54 = dma.hbm_to_vmem [thread:$0]  %s5, 2048, %s49, [#allocation6], 128, 128, 8
    $region25: #{policy_forward.1} parent=1 // pred_fallthru
      _
    // Predicated region
    $region26: #{policy_forward.1} parent=1 // pred_check
      _
    $region27: #{policy_forward.1} parent=1 // pred_check_branch
      %56 = sbr.rel (0) target = $region29
    $region28: #{policy_forward.1} parent=1 // pred_region
      _
    $region29: #{policy_forward.1} parent=1 // pred_fallthru
      _
    // Predicated region
    $region30: #{policy_forward.1} parent=1 // pred_check
      _
    $region31: #{policy_forward.1} parent=1 // pred_check_branch
      %58 = sbr.rel (0) target = $region33
    $region32: #{policy_forward.1} parent=1 // pred_region
      %59 = dma.done [#allocation3], 128
    $region33: #{policy_forward.1} parent=1 // pred_fallthru
      _
    // Predicated region
    $region34: #{policy_forward.1} parent=1 // pred_check
      _
    $region35: #{policy_forward.1} parent=1 // pred_check_branch
      %61 = sbr.rel (0) target = $region37
    $region36: #{policy_forward.1} parent=1 // pred_region
      %62 = dma.done [#allocation6], 2048
    $region37: #{policy_forward.1} parent=1 // pred_fallthru
      _
    // Predicated region
    $region38: #{policy_forward.1} parent=1 // pred_check
      _
    $region39: #{policy_forward.1} parent=1 // pred_check_branch
      %64 = sbr.rel (0) target = $region41
    $region40: #{policy_forward.1} parent=1 // pred_region
      %65 = dma.done [#allocation6], 2048
    $region41: #{policy_forward.1} parent=1 // pred_fallthru
      _
    %v66 = vld [vmem:[%s0] sm:$0xff]
    %v67 = vld [vmem:[#allocation2] sm:$0xff]
    %v68 = vld [vmem:[%s2] sm:$0x1]
    %v70 = vlaneseq
    %v71 = vshrl.u32 %v70, 7
    %v72 = vsub.s32 0, %v71
    %v73 = vrot.slane %v68, %v72
    %vm75 = vcmask 64512
    %v77 = vsel %vm75, %v66, 0
    %79 = vmatprep.subr.mxu0 0.0
    %80 = vmatpush1.msra.mxu0 %v67
    %81 = vmatprep.subr.mxu0 0.0
    %82 = vmatpush1.msra.mxu0 0.0
    %83 = vmatprep.subr.mxu0 0.0
    %84 = vmatpush1.msra.mxu0 0.0
    %85 = vmatprep.subr.mxu0 0.0
    %86 = vmatpush1.msra.mxu0 0.0
    %87 = vmatprep.subr.mxu0 0.0
    %88 = vmatpush1.msra.mxu0 0.0
    %89 = vmatprep.subr.mxu0 0.0
    %90 = vmatpush1.msra.mxu0 0.0
    %91 = vmatprep.subr.mxu0 0.0
    %92 = vmatpush1.msra.mxu0 0.0
    %93 = vmatprep.subr.mxu0 0.0
    %94 = vmatpush1.msra.mxu0 0.0
    %95 = vmatprep.subr.mxu0 0.0
    %96 = vmatpush1.msra.mxu0 0.0
    %97 = vmatprep.subr.mxu0 0.0
    %98 = vmatpush1.msra.mxu0 0.0
    %99 = vmatprep.subr.mxu0 0.0
    %100 = vmatpush1.msra.mxu0 0.0
    %101 = vmatprep.subr.mxu0 0.0
    %102 = vmatpush1.msra.mxu0 0.0
    %103 = vmatprep.subr.mxu0 0.0
    %104 = vmatpush1.msra.mxu0 0.0
    %105 = vmatprep.subr.mxu0 0.0
    %106 = vmatpush1.msra.mxu0 0.0
    %107 = vmatprep.subr.mxu0 0.0
    %108 = vmatpush1.msra.mxu0 0.0
    %109 = vmatprep.subr.mxu0 0.0
    %110 = vmatpush1.msra.mxu0 0.0
    %111 = vmatprep.subr.mxu0 0.0
    %112 = vmatpush1.msra.mxu0 0.0
    %113 = vmatprep.subr.mxu0 0.0
    %114 = vmatpush1.msra.mxu0 0.0
    %115 = vmatprep.subr.mxu0 0.0
    %116 = vmatpush1.msra.mxu0 0.0
    %117 = vmatprep.subr.mxu0 0.0
    %118 = vmatpush1.msra.mxu0 0.0
    %119 = vmatprep.subr.mxu0 0.0
    %120 = vmatpush1.msra.mxu0 0.0
    %121 = vmatprep.subr.mxu0 0.0
    %122 = vmatpush1.msra.mxu0 0.0
    %123 = vmatprep.subr.mxu0 0.0
    %124 = vmatpush1.msra.mxu0 0.0
    %125 = vmatprep.subr.mxu0 0.0
    %126 = vmatpush1.msra.mxu0 0.0
    %127 = vmatprep.subr.mxu0 0.0
    %128 = vmatpush1.msra.mxu0 0.0
    %129 = vmatprep.subr.mxu0 0.0
    %130 = vmatpush1.msra.mxu0 0.0
    %131 = vmatprep.subr.mxu0 0.0
    %132 = vmatpush1.msra.mxu0 0.0
    %133 = vmatprep.subr.mxu0 0.0
    %134 = vmatpush1.msra.mxu0 0.0
    %135 = vmatprep.subr.mxu0 0.0
    %136 = vmatpush1.msra.mxu0 0.0
    %137 = vmatprep.subr.mxu0 0.0
    %138 = vmatpush1.msra.mxu0 0.0
    %139 = vmatprep.subr.mxu0 0.0
    %140 = vmatpush1.msra.mxu0 0.0
    %141 = vmatprep.subr.mxu0 0.0
    %142 = vmatpush1.msra.mxu0 0.0
    %143 = vmatprep.mubr.f32.mxu0 0.0
    %144 = vmatmul.mubr.f32.gmra.mrb[0].mxu0 %v77
    %v145 = vpop.f32.mrb[0].mxu0
    %v146 = vadd.f32 %v73, %v145
    %v147 = vpop.f32.mrb[0].mxu0
    %148 = vdwg.mxu0
    %v149 = vtanh.pop %v146
    %v150 = vld [vmem:[#allocation5] sm:$0xff]
    %v151 = vld [vmem:[#allocation5 + $0x8] sm:$0xff]
    %v152 = vld [vmem:[#allocation5 + $0x10] sm:$0xff]
    %v153 = vld [vmem:[#allocation5 + $0x18] sm:$0xff]
    %v154 = vld [vmem:[#allocation5 + $0x20] sm:$0xff]
    %v155 = vld [vmem:[#allocation5 + $0x28] sm:$0xff]
    %v156 = vld [vmem:[#allocation5 + $0x30] sm:$0xff]
    %v157 = vld [vmem:[#allocation5 + $0x38] sm:$0xff]
    %v158 = vld [vmem:[#allocation5 + $0x40] sm:$0xff]
    %v159 = vld [vmem:[#allocation5 + $0x48] sm:$0xff]
    %v160 = vld [vmem:[#allocation5 + $0x50] sm:$0xff]
    %v161 = vld [vmem:[#allocation5 + $0x58] sm:$0xff]
    %v162 = vld [vmem:[#allocation5 + $0x60] sm:$0xff]
    %v163 = vld [vmem:[#allocation5 + $0x68] sm:$0xff]
    %v164 = vld [vmem:[#allocation5 + $0x70] sm:$0xff]
    %v165 = vld [vmem:[#allocation5 + $0x78] sm:$0xff]
    %v166 = vld [vmem:[%s4] sm:$0x1]
    %v168 = vlaneseq
    %v169 = vshrl.u32 %v168, 7
    %v170 = vsub.s32 0, %v169
    %v171 = vrot.slane %v166, %v170
    %173 = vmatprep.subr.mxu0 0.0
    %174 = vmatpush1.msra.mxu0 %v150
    %175 = vmatprep.subr.mxu0 0.0
    %176 = vmatpush1.msra.mxu0 %v151
    %177 = vmatprep.subr.mxu0 0.0
    %178 = vmatpush1.msra.mxu0 %v152
    %179 = vmatprep.subr.mxu0 0.0
    %180 = vmatpush1.msra.mxu0 %v153
    %181 = vmatprep.subr.mxu0 0.0
    %182 = vmatpush1.msra.mxu0 %v154
    %183 = vmatprep.subr.mxu0 0.0
    %184 = vmatpush1.msra.mxu0 %v155
    %185 = vmatprep.subr.mxu0 0.0
    %186 = vmatpush1.msra.mxu0 %v156
    %187 = vmatprep.subr.mxu0 0.0
    %188 = vmatpush1.msra.mxu0 %v157
    %189 = vmatprep.subr.mxu0 0.0
    %190 = vmatpush1.msra.mxu0 %v158
    %191 = vmatprep.subr.mxu0 0.0
    %192 = vmatpush1.msra.mxu0 %v159
    %193 = vmatprep.subr.mxu0 0.0
    %194 = vmatpush1.msra.mxu0 %v160
    %195 = vmatprep.subr.mxu0 0.0
    %196 = vmatpush1.msra.mxu0 %v161
    %197 = vmatprep.subr.mxu0 0.0
    %198 = vmatpush1.msra.mxu0 %v162
    %199 = vmatprep.subr.mxu0 0.0
    %200 = vmatpush1.msra.mxu0 %v163
    %201 = vmatprep.subr.mxu0 0.0
    %202 = vmatpush1.msra.mxu0 %v164
    %203 = vmatprep.subr.mxu0 0.0
    %204 = vmatpush1.msra.mxu0 %v165
    %205 = vmatprep.subr.mxu0 0.0
    %206 = vmatpush1.msra.mxu0 0.0
    %207 = vmatprep.subr.mxu0 0.0
    %208 = vmatpush1.msra.mxu0 0.0
    %209 = vmatprep.subr.mxu0 0.0
    %210 = vmatpush1.msra.mxu0 0.0
    %211 = vmatprep.subr.mxu0 0.0
    %212 = vmatpush1.msra.mxu0 0.0
    %213 = vmatprep.subr.mxu0 0.0
    %214 = vmatpush1.msra.mxu0 0.0
    %215 = vmatprep.subr.mxu0 0.0
    %216 = vmatpush1.msra.mxu0 0.0
    %217 = vmatprep.subr.mxu0 0.0
    %218 = vmatpush1.msra.mxu0 0.0
    %219 = vmatprep.subr.mxu0 0.0
    %220 = vmatpush1.msra.mxu0 0.0
    %221 = vmatprep.subr.mxu0 0.0
    %222 = vmatpush1.msra.mxu0 0.0
    %223 = vmatprep.subr.mxu0 0.0
    %224 = vmatpush1.msra.mxu0 0.0
    %225 = vmatprep.subr.mxu0 0.0
    %226 = vmatpush1.msra.mxu0 0.0
    %227 = vmatprep.subr.mxu0 0.0
    %228 = vmatpush1.msra.mxu0 0.0
    %229 = vmatprep.subr.mxu0 0.0
    %230 = vmatpush1.msra.mxu0 0.0
    %231 = vmatprep.subr.mxu0 0.0
    %232 = vmatpush1.msra.mxu0 0.0
    %233 = vmatprep.subr.mxu0 0.0
    %234 = vmatpush1.msra.mxu0 0.0
    %235 = vmatprep.subr.mxu0 0.0
    %236 = vmatpush1.msra.mxu0 0.0
    %237 = vmatprep.mubr.f32.mxu0 0.0
    %238 = vmatmul.mubr.f32.gmra.mrb[0].mxu0 %v149
    %v239 = vpop.f32.mrb[0].mxu0
    %v240 = vadd.f32 %v171, %v239
    %v241 = vpop.f32.mrb[0].mxu0
    %242 = vdwg.mxu0
    %v243 = vtanh.pop %v240
    %v244 = vld [vmem:[#allocation7] sm:$0xff]
    %v245 = vld [vmem:[#allocation7 + $0x8] sm:$0xff]
    %v246 = vld [vmem:[#allocation7 + $0x10] sm:$0xff]
    %v247 = vld [vmem:[#allocation7 + $0x18] sm:$0xff]
    %v248 = vld [vmem:[#allocation7 + $0x20] sm:$0xff]
    %v249 = vld [vmem:[#allocation7 + $0x28] sm:$0xff]
    %v250 = vld [vmem:[#allocation7 + $0x30] sm:$0xff]
    %v251 = vld [vmem:[#allocation7 + $0x38] sm:$0xff]
    %v252 = vld [vmem:[#allocation7 + $0x40] sm:$0xff]
    %v253 = vld [vmem:[#allocation7 + $0x48] sm:$0xff]
    %v254 = vld [vmem:[#allocation7 + $0x50] sm:$0xff]
    %v255 = vld [vmem:[#allocation7 + $0x58] sm:$0xff]
    %v256 = vld [vmem:[#allocation7 + $0x60] sm:$0xff]
    %v257 = vld [vmem:[#allocation7 + $0x68] sm:$0xff]
    %v258 = vld [vmem:[#allocation7 + $0x70] sm:$0xff]
    %v259 = vld [vmem:[#allocation7 + $0x78] sm:$0xff]
    %v260 = vld [vmem:[%s6] sm:$0x1]
    %v262 = vlaneseq
    %v263 = vshrl.u32 %v262, 7
    %v264 = vsub.s32 0, %v263
    %v265 = vrot.slane %v260, %v264
    %267 = vmatprep.subr.mxu0 0.0
    %268 = vmatpush1.msra.mxu0 %v244
    %269 = vmatprep.subr.mxu0 0.0
    %270 = vmatpush1.msra.mxu0 %v245
    %271 = vmatprep.subr.mxu0 0.0
    %272 = vmatpush1.msra.mxu0 %v246
    %273 = vmatprep.subr.mxu0 0.0
    %274 = vmatpush1.msra.mxu0 %v247
    %275 = vmatprep.subr.mxu0 0.0
    %276 = vmatpush1.msra.mxu0 %v248
    %277 = vmatprep.subr.mxu0 0.0
    %278 = vmatpush1.msra.mxu0 %v249
    %279 = vmatprep.subr.mxu0 0.0
    %280 = vmatpush1.msra.mxu0 %v250
    %281 = vmatprep.subr.mxu0 0.0
    %282 = vmatpush1.msra.mxu0 %v251
    %283 = vmatprep.subr.mxu0 0.0
    %284 = vmatpush1.msra.mxu0 %v252
    %285 = vmatprep.subr.mxu0 0.0
    %286 = vmatpush1.msra.mxu0 %v253
    %287 = vmatprep.subr.mxu0 0.0
    %288 = vmatpush1.msra.mxu0 %v254
    %289 = vmatprep.subr.mxu0 0.0
    %290 = vmatpush1.msra.mxu0 %v255
    %291 = vmatprep.subr.mxu0 0.0
    %292 = vmatpush1.msra.mxu0 %v256
    %293 = vmatprep.subr.mxu0 0.0
    %294 = vmatpush1.msra.mxu0 %v257
    %295 = vmatprep.subr.mxu0 0.0
    %296 = vmatpush1.msra.mxu0 %v258
    %297 = vmatprep.subr.mxu0 0.0
    %298 = vmatpush1.msra.mxu0 %v259
    %299 = vmatprep.subr.mxu0 0.0
    %300 = vmatpush1.msra.mxu0 0.0
    %301 = vmatprep.subr.mxu0 0.0
    %302 = vmatpush1.msra.mxu0 0.0
    %303 = vmatprep.subr.mxu0 0.0
    %304 = vmatpush1.msra.mxu0 0.0
    %305 = vmatprep.subr.mxu0 0.0
    %306 = vmatpush1.msra.mxu0 0.0
    %307 = vmatprep.subr.mxu0 0.0
    %308 = vmatpush1.msra.mxu0 0.0
    %309 = vmatprep.subr.mxu0 0.0
    %310 = vmatpush1.msra.mxu0 0.0
    %311 = vmatprep.subr.mxu0 0.0
    %312 = vmatpush1.msra.mxu0 0.0
    %313 = vmatprep.subr.mxu0 0.0
    %314 = vmatpush1.msra.mxu0 0.0
    %315 = vmatprep.subr.mxu0 0.0
    %316 = vmatpush1.msra.mxu0 0.0
    %317 = vmatprep.subr.mxu0 0.0
    %318 = vmatpush1.msra.mxu0 0.0
    %319 = vmatprep.subr.mxu0 0.0
    %320 = vmatpush1.msra.mxu0 0.0
    %321 = vmatprep.subr.mxu0 0.0
    %322 = vmatpush1.msra.mxu0 0.0
    %323 = vmatprep.subr.mxu0 0.0
    %324 = vmatpush1.msra.mxu0 0.0
    %325 = vmatprep.subr.mxu0 0.0
    %326 = vmatpush1.msra.mxu0 0.0
    %327 = vmatprep.subr.mxu0 0.0
    %328 = vmatpush1.msra.mxu0 0.0
    %329 = vmatprep.subr.mxu0 0.0
    %330 = vmatpush1.msra.mxu0 0.0
    %331 = vmatprep.mubr.f32.mxu0 0.0
    %332 = vmatmul.mubr.f32.gmra.mrb[0].mxu0 %v243
    %v333 = vpop.f32.mrb[0].mxu0
    %v334 = vadd.f32 %v265, %v333
    %v335 = vpop.f32.mrb[0].mxu0
    %336 = vdwg.mxu0
    %337 = vst [vmem:[#allocation8] sm:$0xff] %v334
    // Predicated region
    $region42: #{policy_forward.1} parent=1 // pred_check
      _
    $region43: #{policy_forward.1} parent=1 // pred_check_branch
      %339 = sbr.rel (0) target = $region45
    $region44: #{policy_forward.1} parent=1 // pred_region
      %s341 = ssub.s32 128, 32
      %342 = vsyncadd [#allocation4], %s341
      %s343 = sshll.u32 [#allocation8], 4
      %s344 = int_to_ptr.vmem [resolvable:$true] %s343
      %349 = dma.vmem_to_hbm [thread:$0]  %s344, 32, %s7, [#allocation4], 32, 32, 2
    $region45: #{policy_forward.1} parent=1 // pred_fallthru
      _
    // Predicated region
    $region46: #{policy_forward.1} parent=1 // pred_check
      _
    $region47: #{policy_forward.1} parent=1 // pred_check_branch
      %351 = sbr.rel (0) target = $region49
    $region48: #{policy_forward.1} parent=1 // pred_region
      %352 = dma.done [#allocation4], 128
    $region49: #{policy_forward.1} parent=1 // pred_fallthru
      _
    %353 = vsyncpa [#allocation3], 1
    %354 = vsyncpa [#allocation6], 1
    %355 = vsyncpa [#allocation4], 1

</llo_original>
